<compile_context>
chip_gen: v6e
topology: v6e:2x2x1
jax: 0.10.0
libtpu: 0.0.40
codegen_flags: <defaults>
</compile_context>

<pallas_src>
import functools

import jax
import jax.numpy as jnp
from jax.experimental import pallas as pl
from jax.experimental.pallas import tpu as pltpu

_LANE = 128  # lane width of a vreg (last dim)


def _default_row_tile():
    """Pick rows-per-block from the device generation (host-side, static)."""
    # 4096 rows * 128 lanes * 4 B = 2 MiB per f32 input per grid step; with
    # double buffering of both inputs that is ~8 MiB of VMEM, safely inside
    # v5e's 16 MiB scoped-VMEM default.  v7x (3.2 TB/s HBM, 32 MiB scoped
    # default on 64 MiB VMEM) wants 4 MiB blocks so the fixed ~0.35 us
    # per-step overhead drops below ~10% of the per-step DMA time.
    try:
        kind = jax.devices()[0].device_kind.lower()
    except Exception:
        return 4096
    if "v7" in kind or "7x" in kind:
        return 8192
    return 4096


def _make_sse_kernel(rows, rt, inner, num_blocks, padded_blocks):
    """Build the SSE kernel body.  All arguments are static Python ints."""
    tail_in_last = (rows % rt) != 0            # last real block overhangs array
    has_padding = padded_blocks > num_blocks   # grid-padded steps exist
    need_mask = tail_in_last or has_padding
    # First global block index that needs row masking.
    mask_from = (num_blocks - 1) if tail_in_last else num_blocks
    folded = (rt % 8) == 0                     # can fold a block into one vreg

    def fold(x):
        if folded:
            # (rt,128) -> (rt//8, 8, 128) matches the natural sublane layout
            # (free); summing axis 0 is a pure cross-vreg VPU add chain
            # (no XLU), leaving a single (8,128) vreg.
            return x.reshape(rt // 8, 8, _LANE).sum(axis=0)
        return x  # tiny single-block case: accumulate the full block shape

    def kernel(s_ref, t_ref, o_ref, acc_ref):
        p = pl.program_id(0)   # per-core (parallel) axis
        k = pl.program_id(1)   # reduction (arbitrary) axis

        @pl.when(k == 0)
        def _():
            acc_ref[...] = jnp.zeros_like(acc_ref)

        d = s_ref[...].astype(jnp.float32) - t_ref[...].astype(jnp.float32)
        sq = d * d

        if need_mask:
            g = p * inner + k   # *unclamped* global block index

            @pl.when(g < mask_from)
            def _():
                acc_ref[...] += fold(sq)

            @pl.when(g >= mask_from)
            def _():
                # Tail / grid-padded step: zero rows that fall outside the
                # array.  Padded steps re-read the last real block via the
                # clamped index_map, so every row masks to zero there.
                row_ids = g * rt + jax.lax.broadcasted_iota(
                    jnp.int32, sq.shape, 0)
                acc_ref[...] += fold(jnp.where(row_ids < rows, sq, 0.0))
        else:
            acc_ref[...] += fold(sq)

        @pl.when(k == pl.num_programs(1) - 1)
        def _():
            # One small sublane (XLU) reduce per core; the remaining 128-lane
            # sum happens in the wrapper (XLA).  Output is lane-dense.
            o_ref[...] = jnp.sum(acc_ref[...], axis=0).reshape(1, 1, _LANE)

    acc_rows = 8 if folded else rt
    return kernel, acc_rows


@functools.partial(jax.jit, static_argnames=("row_tile",))
def _pallas_mse(student, teacher, *, row_tile=4096):
    """Mean squared error between two same-shaped tensors via a Pallas kernel."""
    assert student.shape == teacher.shape, (student.shape, teacher.shape)
    numel = student.size
    s_flat = student.reshape(-1)   # contiguous reshape: no copy
    t_flat = teacher.reshape(-1)

    # Rare (<128-element) flat tail when numel is not a multiple of the lane
    # width: handled in plain XLA so the kernel path stays copy-free.
    main = (numel // _LANE) * _LANE
    tail_sse = jnp.float32(0.0)
    if main != numel:
        ts = s_flat[main:].astype(jnp.float32)
        tt = t_flat[main:].astype(jnp.float32)
        tail_sse = jnp.sum((ts - tt) ** 2)
        s_flat = s_flat[:main]
        t_flat = t_flat[:main]
    if main == 0:
        return tail_sse / jnp.float32(numel)

    rows = main // _LANE
    s2 = s_flat.reshape(rows, _LANE)
    t2 = t_flat.reshape(rows, _LANE)

    rt = min(row_tile, rows)            # full-extent block when input is small
    num_blocks = pl.cdiv(rows, rt)

    # Always split the block stream across v7x's two TensorCores when there is
    # more than one block.  With an odd block count the grid is padded by one
    # step whose contribution is zeroed in-kernel, so no shape falls back to a
    # single-core reduction.  On single-TC v5e/v6e the p axis is a harmless
    # serial loop of length 2.
    if num_blocks >= 2:
        ncores = 2
        inner = pl.cdiv(num_blocks, 2)
    else:
        ncores, inner = 1, num_blocks
    padded_blocks = ncores * inner

    kernel, acc_rows = _make_sse_kernel(rows, rt, inner, num_blocks,
                                        padded_blocks)

    last_block = num_blocks - 1

    def in_map(p, k):
        # Clamp so grid-padded steps re-read the last real block (their
        # contribution is zeroed by the in-kernel row mask).
        return (jnp.minimum(p * inner + k, last_block), 0)

    in_spec = pl.BlockSpec((rt, _LANE), in_map)
    itemsize = student.dtype.itemsize

    partials = pl.pallas_call(
        kernel,
        out_shape=jax.ShapeDtypeStruct((ncores, 1, _LANE), jnp.float32),
        grid_spec=pltpu.PrefetchScalarGridSpec(
            num_scalar_prefetch=0,
            grid=(ncores, inner),
            in_specs=[in_spec, in_spec],
            out_specs=pl.BlockSpec((1, 1, _LANE), lambda p, k: (p, 0, 0)),
            scratch_shapes=[pltpu.VMEM((acc_rows, _LANE), jnp.float32)],
        ),
        compiler_params=pltpu.CompilerParams(
            # p: independent per-core partial sums (shards across TensorCores
            # on multi-core parts, per the documented megacore behavior);
            # k: serial reduction axis.
            dimension_semantics=("parallel", "arbitrary"),
        ),
        cost_estimate=pl.CostEstimate(
            flops=3 * main,                 # sub + mul + add per element
            transcendentals=0,
            bytes_accessed=2 * main * itemsize + ncores * _LANE * 4,
        ),
    )(s2, t2)

    sse = jnp.sum(partials) + tail_sse
    return sse / jnp.float32(numel)


class BaseDistiller:
    """Faithful port of the PyTorch BaseDistiller dispatch logic (no parameters)."""

    def __init__(self):
        self.need_matcher = False

    def __call__(self, student_outputs, teacher_outputs, meta=None):
        if self.need_matcher:
            losses = self.match_distill(student_outputs, teacher_outputs, meta)
        else:
            losses = self.distill(student_outputs, teacher_outputs, meta)
        return losses

    def distill(self, student_outputs, teacher_outputs, meta=None):
        # TODO(synk): base class is abstract in the reference (raises
        # NotImplementedError); concrete distillation math lives in subclasses.
        raise NotImplementedError("")


class MSEDistiller(BaseDistiller):
    """Minimal concrete distiller: MSE(student, teacher) on the Pallas hot path."""

    def distill(self, student_outputs, teacher_outputs, meta=None):
        # Pass activations in their native precision (bf16/fp8): the kernel
        # upcasts to f32 on-chip, so low-precision inputs halve HBM traffic.
        loss = _pallas_mse(student_outputs, teacher_outputs,
                           row_tile=_default_row_tile())
        return {"loss_distill": loss}


if __name__ == "__main__":
    key = jax.random.PRNGKey(0)
    k_s, k_t = jax.random.split(key)

    # NCHW student / teacher feature maps (small synthetic shapes).
    student = jax.random.normal(k_s, (2, 4, 16, 16), dtype=jnp.float32)
    teacher = jax.random.normal(k_t, (2, 4, 16, 16), dtype=jnp.float32)

    distiller = MSEDistiller()
    losses = distiller(student, teacher)
    loss = jax.block_until_ready(losses["loss_distill"])

    # Sanity check against plain-JAX reference.
    ref = jnp.mean((student - teacher) ** 2)
    assert jnp.allclose(loss, ref, rtol=1e-5, atol=1e-6), (loss, ref)

    print("KERNEL_OK")
</pallas_src>

<mosaic_0001>
module attributes {stable_mosaic.version = 11 : i64} {
  func.func @kernel(%arg0: i32, %arg1: i32, %arg2: memref<16x128xf32, #tpu.memory_space<vmem>>, %arg3: memref<16x128xf32, #tpu.memory_space<vmem>>, %arg4: memref<1x1x128xf32, #tpu.memory_space<vmem>>, %arg5: memref<8x128xf32, #tpu.memory_space<vmem>>) attributes {dimension_semantics = [#tpu.dimension_semantics<parallel>, #tpu.dimension_semantics<arbitrary>], iteration_bounds = array<i64: 1, 1>, scalar_prefetch = 0 : i64, scratch_operands = 1 : i64, tpu.core_type = #tpu.core_type<tc>, window_params = [{transform_indices = @transform_0, window_bounds = array<i64: 16, 128>}, {transform_indices = @transform_1, window_bounds = array<i64: 16, 128>}, {transform_indices = @transform_2, window_bounds = array<i64: 1, 1, 128>}]} {
    %c0_i32 = arith.constant 0 : i32
    %0 = arith.cmpi eq, %arg1, %c0_i32 : i32
    %1 = arith.extui %0 : i1 to i32
    %c0_i32_0 = arith.constant 0 : i32
    %2 = arith.cmpi ne, %1, %c0_i32_0 : i32
    scf.if %2 {
      %cst_10 = arith.constant 0.000000e+00 : f32
      %15 = vector.broadcast %cst_10 : f32 to vector<8x128xf32>
      %c0_11 = arith.constant 0 : index
      %c0_12 = arith.constant 0 : index
      %16 = vector.load %arg5[%c0_11, %c0_12] : memref<8x128xf32, #tpu.memory_space<vmem>>, vector<8x128xf32>
      tpu.vector_store %arg5[%c0_11, %c0_12], %15 {strides = array<i32>} : memref<8x128xf32, #tpu.memory_space<vmem>>, vector<8x128xf32>,
    } else {
    }
    %c0 = arith.constant 0 : index
    %c0_1 = arith.constant 0 : index
    %3 = vector.load %arg2[%c0, %c0_1] : memref<16x128xf32, #tpu.memory_space<vmem>>, vector<16x128xf32>
    %c0_2 = arith.constant 0 : index
    %c0_3 = arith.constant 0 : index
    %4 = vector.load %arg3[%c0_2, %c0_3] : memref<16x128xf32, #tpu.memory_space<vmem>>, vector<16x128xf32>
    %5 = arith.subf %3, %4 : vector<16x128xf32>
    %6 = arith.mulf %5, %5 : vector<16x128xf32>
    %c0_4 = arith.constant 0 : index
    %c0_5 = arith.constant 0 : index
    %7 = vector.load %arg5[%c0_4, %c0_5] : memref<8x128xf32, #tpu.memory_space<vmem>>, vector<8x128xf32>
    %8 = vector.shape_cast %6 : vector<16x128xf32> to vector<2x8x128xf32>
    %cst = arith.constant dense<0.000000e+00> : vector<8x128xf32>
    %9 = vector.multi_reduction <add>, %8, %cst [0] : vector<2x8x128xf32> to vector<8x128xf32>
    %10 = arith.addf %7, %9 : vector<8x128xf32>
    %c0_6 = arith.constant 0 : index
    %c0_7 = arith.constant 0 : index
    %11 = vector.load %arg5[%c0_6, %c0_7] : memref<8x128xf32, #tpu.memory_space<vmem>>, vector<8x128xf32>
    tpu.vector_store %arg5[%c0_6, %c0_7], %10 {strides = array<i32>} : memref<8x128xf32, #tpu.memory_space<vmem>>, vector<8x128xf32>,
    %c0_i32_8 = arith.constant 0 : i32
    %12 = arith.cmpi eq, %arg1, %c0_i32_8 : i32
    %13 = arith.extui %12 : i1 to i32
    %c0_i32_9 = arith.constant 0 : i32
    %14 = arith.cmpi ne, %13, %c0_i32_9 : i32
    scf.if %14 {
      %c0_10 = arith.constant 0 : index
      %c0_11 = arith.constant 0 : index
      %15 = vector.load %arg5[%c0_10, %c0_11] : memref<8x128xf32, #tpu.memory_space<vmem>>, vector<8x128xf32>
      %cst_12 = arith.constant dense<0.000000e+00> : vector<128xf32>
      %16 = vector.multi_reduction <add>, %15, %cst_12 [0] : vector<8x128xf32> to vector<128xf32>
      %17 = vector.shape_cast %16 : vector<128xf32> to vector<1x1x128xf32>
      %c0_13 = arith.constant 0 : index
      %c0_14 = arith.constant 0 : index
      %c0_15 = arith.constant 0 : index
      %18 = vector.load %arg4[%c0_13, %c0_14, %c0_15] : memref<1x1x128xf32, #tpu.memory_space<vmem>>, vector<1x1x128xf32>
      tpu.vector_store %arg4[%c0_13, %c0_14, %c0_15], %17 {strides = array<i32>} : memref<1x1x128xf32, #tpu.memory_space<vmem>>, vector<1x1x128xf32>,
    } else {
    }
    return
  }
  func.func @transform_0(%arg0: i32, %arg1: i32) -> (i32, i32) {
    %c1_i32 = arith.constant 1 : i32
    %0 = arith.muli %arg0, %c1_i32 : i32
    %1 = arith.addi %0, %arg1 : i32
    %c0_i32 = arith.constant 0 : i32
    %2 = arith.minsi %1, %c0_i32 : i32
    %c0_i32_0 = arith.constant 0 : i32
    %c0_i32_1 = arith.constant 0 : i32
    return %2, %c0_i32_0 : i32, i32
  }
  func.func @transform_1(%arg0: i32, %arg1: i32) -> (i32, i32) {
    %c1_i32 = arith.constant 1 : i32
    %0 = arith.muli %arg0, %c1_i32 : i32
    %1 = arith.addi %0, %arg1 : i32
    %c0_i32 = arith.constant 0 : i32
    %2 = arith.minsi %1, %c0_i32 : i32
    %c0_i32_0 = arith.constant 0 : i32
    %c0_i32_1 = arith.constant 0 : i32
    return %2, %c0_i32_0 : i32, i32
  }
  func.func @transform_2(%arg0: i32, %arg1: i32) -> (i32, i32, i32) {
    %c0_i32 = arith.constant 0 : i32
    %c0_i32_0 = arith.constant 0 : i32
    %c0_i32_1 = arith.constant 0 : i32
    return %arg0, %c0_i32, %c0_i32_0 : i32, i32, i32
  }
}

</mosaic_0001>

<llo_original>
// kernel: _pallas_mse.1
$region0: #{_pallas_mse.1}
  #allocation0 [shape = 'u32[]', space=smem, size = 0x4, offset = 0x4, fixed_abs, tag = 'smem constant byte address 0x4 - core index']
  #allocation1 [shape = 'u32[144,128]{1,0:T(1,128)}', space=vmem, size = 0x12000, scoped, tag = 'internal scratch']
  #allocation2 [shape = 'f32[8,128]{1,0:T(8,128)}', space=vmem, size = 0x1000, scoped, tag = 'scratch operand']
  %s0 = inlined_call_operand.vmem [shape: f32[16,128], index: 0, kind: input, shape index: {}]
  %s1 = inlined_call_operand.vmem [shape: f32[16,128], index: 1, kind: input, shape index: {}]
  %s2 = inlined_call_operand.vmem [shape: f32[1,1,128], index: 2, kind: output, shape index: {}]
  %s3 = sld [smem:[#allocation0]]
  $region26: #{_pallas_mse.1} parent=0
    _
  %s5 = ssub.s32 1, %s3
  %s6 = scalar_select 0, %s5, %s3
  // Predicated region
  $region2: #{_pallas_mse.1} parent=0 // pred_check
    _
  $region3: #{_pallas_mse.1} parent=0 // pred_check_branch
    %8 = sbr.rel (0) target = $region5
  $region4: #{_pallas_mse.1} parent=0 // pred_region
    %s9 = sadd.s32 0, 0
    %p10 = scmp.lt.s32.totalorder %s9, 0
    %s11 = scalar_select %p10, %s9, 0
    %s12 = smul.u32 2, %s11
    %p13 = scmp.lt.s32.totalorder %s12, 1
    %s14 = scalar_select %p13, %s12, 1
    %s15 = smul.addr %s14, 8
    %s16 = scalar_lea.vmem %s0, %s15
    %s17 = sadd.s32 0, 0
    %p18 = scmp.lt.s32.totalorder %s17, 0
    %s19 = scalar_select %p18, %s17, 0
    %s20 = smul.u32 2, %s19
  $region5: #{_pallas_mse.1} parent=0 // pred_fallthru
    _
  // Predicated region
  $region6: #{_pallas_mse.1} parent=0 // pred_check
    _
  $region7: #{_pallas_mse.1} parent=0 // pred_check_branch
    %22 = sbr.rel (0) target = $region9
  $region8: #{_pallas_mse.1} parent=0 // pred_region
    %s23 = sadd.s32 0, 0
    %p24 = scmp.lt.s32.totalorder %s23, 0
    %s25 = scalar_select %p24, %s23, 0
    %s26 = smul.u32 2, %s25
    %p27 = scmp.lt.s32.totalorder %s26, 1
    %s28 = scalar_select %p27, %s26, 1
    %s29 = smul.addr %s28, 8
    %s30 = scalar_lea.vmem %s1, %s29
    %s31 = sadd.s32 0, 0
    %p32 = scmp.lt.s32.totalorder %s31, 0
    %s33 = scalar_select %p32, %s31, 0
    %s34 = smul.u32 2, %s33
  $region9: #{_pallas_mse.1} parent=0 // pred_fallthru
    _
  %s35 = sadd.s32 0, 0
  %p36 = scmp.lt.s32.totalorder %s35, 0
  %s37 = scalar_select %p36, %s35, 0
  %s38 = smul.u32 2, %s37
  %p39 = scmp.lt.s32.totalorder %s38, 1
  %s40 = scalar_select %p39, %s38, 1
  %s41 = smul.addr %s40, 8
  %s42 = scalar_lea.vmem %s0, %s41
  %s43 = sadd.s32 0, 0
  %p44 = scmp.lt.s32.totalorder %s43, 0
  %s45 = scalar_select %p44, %s43, 0
  %s46 = smul.u32 2, %s45
  %p47 = scmp.lt.s32.totalorder %s46, 1
  %s48 = scalar_select %p47, %s46, 1
  %s49 = smul.addr %s48, 8
  %s50 = scalar_lea.vmem %s1, %s49
  %s51 = sadd.s32 0, 0
  %p52 = scmp.lt.s32.totalorder %s51, 0
  %s53 = scalar_select %p52, %s51, 0
  %s54 = smul.u32 2, %s53
  %p55 = scmp.lt.s32.totalorder %s54, 1
  %s56 = scalar_select %p55, %s54, 1
  %s57 = smul.addr %s56, 8
  %s58 = scalar_lea.vmem %s0, %s57
  %s59 = sadd.s32 0, 0
  %p60 = scmp.lt.s32.totalorder %s59, 0
  %s61 = scalar_select %p60, %s59, 0
  %s62 = smul.u32 2, %s61
  %s63 = sadd.s32 0, 0
  %p64 = scmp.lt.s32.totalorder %s63, 0
  %s65 = scalar_select %p64, %s63, 0
  %s66 = smul.u32 2, %s65
  %p67 = scmp.lt.s32.totalorder %s66, 1
  %s68 = scalar_select %p67, %s66, 1
  %s69 = smul.addr %s68, 8
  %s70 = scalar_lea.vmem %s1, %s69
  %s71 = sadd.s32 0, 0
  %p72 = scmp.lt.s32.totalorder %s71, 0
  %s73 = scalar_select %p72, %s71, 0
  %s74 = smul.u32 2, %s73
  %p75 = scmp.eq.s32.totalorder 0, 0
  // Predicated region
  $region10: #{_pallas_mse.1} parent=0 // pred_check
    %p76 = pneg %p75
  $region11: #{_pallas_mse.1} parent=0 // pred_check_branch
    %78 = sbr.rel (%p76) target = $region13
  $region12: #{_pallas_mse.1} parent=0 // pred_region
    %79 = vst [vmem:[#allocation2] sm:$0xff] 0.0
  $region13: #{_pallas_mse.1} parent=0 // pred_fallthru
    _
  %v80 = vld [vmem:[%s58] sm:$0xff]
  %v81 = vld [vmem:[%s58 + $0x8] sm:$0xff]
  %v82 = vld [vmem:[%s70] sm:$0xff]
  %v83 = vld [vmem:[%s70 + $0x8] sm:$0xff]
  %v84 = vsub.f32 %v80, %v82
  %v85 = vsub.f32 %v81, %v83
  %v86 = vmul.f32 %v84, %v84
  %v87 = vmul.f32 %v85, %v85
  %v88 = vld [vmem:[#allocation2] sm:$0xff]
  %v89 = vadd.f32 %v86, %v87
  %v90 = vadd.f32 %v88, %v89
  %91 = vst [vmem:[#allocation2] sm:$0xff] %v90
  // Predicated region
  $region14: #{_pallas_mse.1} parent=0 // pred_check
    %p92 = pneg %p75
  $region15: #{_pallas_mse.1} parent=0 // pred_check_branch
    %94 = sbr.rel (%p92) target = $region17
  $region16: #{_pallas_mse.1} parent=0 // pred_region
    %v95 = vld [vmem:[#allocation2] sm:$0xff]
    %v96 = vrot.slane %v95, 4
    %v97 = vadd.f32 %v95, %v96
    %v98 = vrot.slane %v97, 2
    %v99 = vadd.f32 %v97, %v98
    %v100 = vrot.slane %v99, 1
    %v101 = vadd.f32 %v99, %v100
    %102 = vst [vmem:[%s2] sm:$0x1] %v101
  $region17: #{_pallas_mse.1} parent=0 // pred_fallthru
    _
  // Predicated region
  $region18: #{_pallas_mse.1} parent=0 // pred_check
    _
  $region19: #{_pallas_mse.1} parent=0 // pred_check_branch
    %104 = sbr.rel (0) target = $region21
  $region20: #{_pallas_mse.1} parent=0 // pred_region
    _
  $region21: #{_pallas_mse.1} parent=0 // pred_fallthru
    _
  // Predicated region
  $region22: #{_pallas_mse.1} parent=0 // pred_check
    _
  $region23: #{_pallas_mse.1} parent=0 // pred_check_branch
    %106 = sbr.rel (0) target = $region25
  $region24: #{_pallas_mse.1} parent=0 // pred_region
    _
  $region25: #{_pallas_mse.1} parent=0 // pred_fallthru
    _

</llo_original>
